<compile_context>
chip_gen: v7x
topology: tpu7x:2x2x1
jax: 0.10.0
libtpu: 0.0.40
codegen_flags: <defaults>
</compile_context>

<pallas_src>
import jax
import jax.numpy as jnp
from jax.experimental import pallas as pl
from jax.experimental.pallas import tpu as pltpu

_LN_EPS = 1e-5
_LANES = 128


def _round_up(x, m):
    return ((x + m - 1) // m) * m


def _cdiv(a, b):
    return -(-a // b)


# ---------------------------------------------------------------------------
# Packed kernel: G = 128 // F original rows packed onto the lane axis.
#   wc_ref, hc_ref    : (TM, 128) packed input row tiles (native dtype)
#   wcw_ref, wch_ref  : (128, 128) block-diag folded weights (+0.5*I residual)
#   msum_ref          : (128, 128) block-diag segment-mean matrix (f32)
#   pgb_ref           : (3, 128)   [bias; gamma; beta] tiled G times (f32)
#   out_ref           : (TM, 128)
# ---------------------------------------------------------------------------
def _fusion_packed_kernel(wc_ref, hc_ref, wcw_ref, wch_ref, msum_ref,
                          pgb_ref, out_ref):
    mm_dtype = wcw_ref.dtype
    prec = jax.lax.Precision.HIGHEST if mm_dtype == jnp.float32 else None
    wc = wc_ref[...].astype(mm_dtype)
    hc = hc_ref[...].astype(mm_dtype)
    pgb = pgb_ref[...]

    # fused projection + residual (folded into the weights) + bias
    x = jnp.dot(wc, wcw_ref[...], preferred_element_type=jnp.float32,
                precision=prec)
    x = x + jnp.dot(hc, wch_ref[...], preferred_element_type=jnp.float32,
                    precision=prec)
    x = x + pgb[0:1, :]

    # LayerNorm over each F-lane segment.  Both statistics matmuls are
    # independent and issued back-to-back (no drain stall between them).
    msum = msum_ref[...]
    mean = jnp.dot(x, msum, preferred_element_type=jnp.float32,
                   precision=jax.lax.Precision.HIGHEST)
    ex2 = jnp.dot(x * x, msum, preferred_element_type=jnp.float32,
                  precision=jax.lax.Precision.HIGHEST)
    var = jnp.maximum(ex2 - mean * mean, 0.0)
    xn = (x - mean) * jax.lax.rsqrt(var + _LN_EPS)
    out_ref[...] = (xn * pgb[1:2, :] + pgb[2:3, :]).astype(out_ref.dtype)


# ---------------------------------------------------------------------------
# Fallback kernel (F >= 128 or F does not divide 128): plain row tiling.
# ---------------------------------------------------------------------------
def _fusion_rows_kernel(wc_ref, hc_ref, wcw_ref, wch_ref, pgb_ref, out_ref):
    mm_dtype = wcw_ref.dtype
    prec = jax.lax.Precision.HIGHEST if mm_dtype == jnp.float32 else None
    wc = wc_ref[...].astype(mm_dtype)
    hc = hc_ref[...].astype(mm_dtype)
    pgb = pgb_ref[...]

    x = jnp.dot(wc, wcw_ref[...], preferred_element_type=jnp.float32,
                precision=prec)
    x = x + jnp.dot(hc, wch_ref[...], preferred_element_type=jnp.float32,
                    precision=prec)
    x = x + pgb[0:1, :]

    mean = jnp.mean(x, axis=-1, keepdims=True)
    ex2 = jnp.mean(x * x, axis=-1, keepdims=True)
    var = jnp.maximum(ex2 - mean * mean, 0.0)
    xn = (x - mean) * jax.lax.rsqrt(var + _LN_EPS)
    out_ref[...] = (xn * pgb[1:2, :] + pgb[2:3, :]).astype(out_ref.dtype)


def _fold_params(params, fusion_type, feature_num):
    """Parameter-only preprocessing (all f32): fold proj->fuse->out_proj and
    the residual into two (F,F) matrices and one (F,) bias."""
    f32 = jnp.float32
    Ww = params["w_proj_w"].astype(f32)
    bw = params["w_proj_b"].astype(f32)
    Wh = params["h_proj_w"].astype(f32)
    bh = params["h_proj_b"].astype(f32)
    Wo = params["o_proj_w"].astype(f32)
    bo = params["o_proj_b"].astype(f32)
    gamma = params["ln_gamma"].astype(f32)
    beta = params["ln_beta"].astype(f32)

    if fusion_type == "weighted":
        sw = jax.nn.sigmoid(params["wavelet_weight"].astype(f32)).reshape(())
        sh = jax.nn.sigmoid(params["hht_weight"].astype(f32)).reshape(())
        denom = sw + sh
        a, b = sw / denom, sh / denom
    else:  # 'concat' in the reference source is a plain sum of the two feats
        a = jnp.asarray(1.0, f32)
        b = jnp.asarray(1.0, f32)

    hp = jax.lax.Precision.HIGHEST
    eye_f = jnp.eye(feature_num, dtype=f32)
    # Residual (wavelet + hht)/2 is folded into the weights via + 0.5*I.
    Wcw = jnp.dot(a * Ww, Wo, precision=hp) + 0.5 * eye_f
    Wch = jnp.dot(b * Wh, Wo, precision=hp) + 0.5 * eye_f
    b_total = jnp.dot(a * bw + b * bh, Wo, precision=hp) + bo
    return Wcw, Wch, b_total, gamma, beta


def _select_tiling(n_rows, lane_width, in_itemsize, out_itemsize, tile_rows,
                   fixed_bytes):
    """Per-chip row-tile size + vmem limit."""
    try:
        vmem_cap = int(pltpu.get_tpu_info().vmem_capacity_bytes)
    except Exception:
        vmem_cap = 64 * 2 ** 20  # conservative (v7x-sized) default
    budget = min(96 * 2 ** 20, (vmem_cap * 3) // 4)   # 96 MiB v5e/v6e, 48 MiB v7x
    tm_target = tile_rows if tile_rows is not None else (
        4096 if budget >= 90 * 2 ** 20 else 2048)
    # Ensure >= 2 grid steps when there is enough work so ("parallel",) can
    # shard the grid across both TensorCores on dual-TC chips (v7x).
    tm = max(8, _round_up(min(int(tm_target), _round_up(_cdiv(n_rows, 2), 8)), 8))
    # Approximate VMEM need: double-buffered inputs/output + f32 intermediates.
    per_row = lane_width * (4 * in_itemsize + 2 * out_itemsize + 6 * 4)
    while tm > 8 and fixed_bytes + tm * per_row > budget:
        tm = max(8, _round_up(tm // 2, 8))
    return tm, int(budget)


def wavelet_hht_fusion(wavelet_comp, hht_comp, params, *,
                       fusion_type="weighted", tile_rows=None):
    """Forward pass of WaveletHHTFusionBlock (eval mode). Inputs: (B, S, F)."""
    assert fusion_type in ("weighted", "concat"), (
        "fusion_type='attention' requires OrdinaryAttention (undefined in the spec)")
    B, S, F = wavelet_comp.shape
    N = B * S
    out_dtype = wavelet_comp.dtype
    mm_dtype = jnp.bfloat16 if wavelet_comp.dtype == jnp.bfloat16 else jnp.float32

    Wcw, Wch, b_total, gamma, beta = _fold_params(params, fusion_type, F)

    wc2 = wavelet_comp.reshape(N, F)
    hc2 = hht_comp.reshape(N, F)
    in_itemsize = jnp.dtype(wc2.dtype).itemsize
    out_itemsize = jnp.dtype(out_dtype).itemsize

    packed = (F < _LANES) and (_LANES % F == 0)

    if packed:
        # ---- lane-dense packed path --------------------------------------
        G = _LANES // F
        M = _cdiv(N, G)
        N_up = M * G
        if N_up != N:
            # Pad only to a multiple of G (< 128 rows) so the lane-packing
            # reshape is legal; ragged grid blocks are masked by Pallas.
            wc2 = jnp.pad(wc2, ((0, N_up - N), (0, 0)))
            hc2 = jnp.pad(hc2, ((0, N_up - N), (0, 0)))
        wcp = wc2.reshape(M, _LANES)
        hcp = hc2.reshape(M, _LANES)

        eye_g = jnp.eye(G, dtype=jnp.float32)
        wcw_bd = jnp.kron(eye_g, Wcw).astype(mm_dtype)                  # (128,128)
        wch_bd = jnp.kron(eye_g, Wch).astype(mm_dtype)                  # (128,128)
        msum = jnp.kron(eye_g, jnp.full((F, F), 1.0 / F, jnp.float32))  # (128,128)
        pgb = jnp.stack([jnp.tile(b_total, G),
                         jnp.tile(gamma, G),
                         jnp.tile(beta, G)])                            # (3,128)

        TM, vmem_limit = _select_tiling(M, _LANES, in_itemsize, out_itemsize,
                                        tile_rows,
                                        fixed_bytes=3 * _LANES * _LANES * 4
                                        + 8 * _LANES * 4)
        grid = (_cdiv(M, TM),)
        row_spec = pl.BlockSpec((TM, _LANES), lambda i: (i, 0))
        const = lambda r, c: pl.BlockSpec((r, c), lambda i: (0, 0))

        out_p = pl.pallas_call(
            _fusion_packed_kernel,
            out_shape=jax.ShapeDtypeStruct((M, _LANES), out_dtype),
            grid=grid,
            in_specs=[row_spec, row_spec,
                      const(_LANES, _LANES), const(_LANES, _LANES),
                      const(_LANES, _LANES), const(3, _LANES)],
            out_specs=row_spec,
            compiler_params=pltpu.CompilerParams(
                dimension_semantics=("parallel",),
                vmem_limit_bytes=vmem_limit),
        )(wcp, hcp, wcw_bd, wch_bd, msum, pgb)

        out = out_p.reshape(N_up, F)
        if N_up != N:
            out = out[:N]
    else:
        # ---- generic row-tiled path (F already lane-dense or irregular) ---
        # TODO(synk): could lane-pad F to a multiple of 128 for unmasked
        # stores when F % 128 != 0; skipped (low priority, adds a col slice).
        TM, vmem_limit = _select_tiling(N, F, in_itemsize, out_itemsize,
                                        tile_rows,
                                        fixed_bytes=2 * F * F * 4 + 8 * F * 4)
        grid = (_cdiv(N, TM),)
        row_spec = pl.BlockSpec((TM, F), lambda i: (i, 0))
        const = lambda r, c: pl.BlockSpec((r, c), lambda i: (0, 0))
        pgb = jnp.stack([b_total, gamma, beta])                         # (3,F)

        out = pl.pallas_call(
            _fusion_rows_kernel,
            out_shape=jax.ShapeDtypeStruct((N, F), out_dtype),
            grid=grid,
            in_specs=[row_spec, row_spec, const(F, F), const(F, F), const(3, F)],
            out_specs=row_spec,
            compiler_params=pltpu.CompilerParams(
                dimension_semantics=("parallel",),
                vmem_limit_bytes=vmem_limit),
        )(wc2, hc2, Wcw.astype(mm_dtype), Wch.astype(mm_dtype), pgb)

    return out.reshape(B, S, F)


def _reference(wavelet, hht, params, fusion_type="weighted"):
    """Pure-JAX reference mirroring the PyTorch forward (eval mode)."""
    wf = wavelet @ params["w_proj_w"] + params["w_proj_b"]
    hf = hht @ params["h_proj_w"] + params["h_proj_b"]
    if fusion_type == "weighted":
        w = jax.nn.sigmoid(params["wavelet_weight"])
        h = jax.nn.sigmoid(params["hht_weight"])
        fused = (w * wf + h * hf) / (w + h)
    else:
        fused = wf + hf
    out = fused @ params["o_proj_w"] + params["o_proj_b"]
    x = out + (wavelet.astype(jnp.float32) + hht.astype(jnp.float32)) / 2.0
    mean = jnp.mean(x, axis=-1, keepdims=True)
    var = jnp.mean((x - mean) ** 2, axis=-1, keepdims=True)
    xn = (x - mean) / jnp.sqrt(var + _LN_EPS)
    return xn * params["ln_gamma"] + params["ln_beta"]


def _make_params(key, F, D):
    keys = jax.random.split(key, 6)
    return {
        "w_proj_w": 0.1 * jax.random.normal(keys[0], (F, D), jnp.float32),
        "w_proj_b": 0.1 * jax.random.normal(keys[1], (D,), jnp.float32),
        "h_proj_w": 0.1 * jax.random.normal(keys[2], (F, D), jnp.float32),
        "h_proj_b": 0.1 * jax.random.normal(keys[3], (D,), jnp.float32),
        "o_proj_w": 0.1 * jax.random.normal(keys[4], (D, F), jnp.float32),
        "o_proj_b": 0.1 * jax.random.normal(keys[5], (F,), jnp.float32),
        "wavelet_weight": jnp.ones((1,), jnp.float32),  # nn.Parameter(torch.ones(1))
        "hht_weight": jnp.ones((1,), jnp.float32),
        "ln_gamma": jnp.ones((F,), jnp.float32),
        "ln_beta": jnp.zeros((F,), jnp.float32),
    }


if __name__ == "__main__":
    # Make the pure-JAX reference use full-precision f32 matmuls so the
    # comparison tolerance can stay tight (the kernel uses HIGHEST explicitly).
    jax.config.update("jax_default_matmul_precision", "highest")

    fusion = jax.jit(wavelet_hht_fusion, static_argnames=("fusion_type", "tile_rows"))
    key = jax.random.PRNGKey(0)

    # --- test 1: module shapes (F=4, D=32), packed lane-dense path ----------
    B, S, F, D = 2, 8, 4, 32
    kp, kw, kh, key2 = jax.random.split(key, 4)
    params = _make_params(kp, F, D)
    wavelet = jax.random.normal(kw, (B, S, F), jnp.float32)
    hht = jax.random.normal(kh, (B, S, F), jnp.float32)

    out = fusion(wavelet, hht, params, fusion_type="weighted")
    jax.block_until_ready(out)
    ref = _reference(wavelet, hht, params, fusion_type="weighted")
    assert out.shape == (B, S, F)
    assert jnp.allclose(out, ref, rtol=1e-4, atol=1e-4), "weighted mismatch"

    out_c = fusion(wavelet, hht, params, fusion_type="concat")
    jax.block_until_ready(out_c)
    ref_c = _reference(wavelet, hht, params, fusion_type="concat")
    assert jnp.allclose(out_c, ref_c, rtol=1e-4, atol=1e-4), "concat mismatch"

    # --- test 2: lane-dense feature dim (F=128, D=64), fallback path --------
    B2, S2, F2, D2 = 2, 8, 128, 64
    kp2, kw2, kh2, key3 = jax.random.split(key2, 4)
    params2 = _make_params(kp2, F2, D2)
    wavelet2 = jax.random.normal(kw2, (B2, S2, F2), jnp.float32)
    hht2 = jax.random.normal(kh2, (B2, S2, F2), jnp.float32)

    out2 = fusion(wavelet2, hht2, params2, fusion_type="weighted")
    jax.block_until_ready(out2)
    ref2 = _reference(wavelet2, hht2, params2, fusion_type="weighted")
    assert out2.shape == (B2, S2, F2)
    assert jnp.allclose(out2, ref2, rtol=1e-4, atol=1e-4), "fallback mismatch"

    # --- test 3: bf16 inputs use bf16 MXU operands (v5e fast path) ----------
    wav_bf = wavelet.astype(jnp.bfloat16)
    hht_bf = hht.astype(jnp.bfloat16)
    out3 = fusion(wav_bf, hht_bf, params, fusion_type="weighted")
    jax.block_until_ready(out3)
    ref3 = _reference(wav_bf, hht_bf, params, fusion_type="weighted")
    assert out3.dtype == jnp.bfloat16
    assert jnp.allclose(out3.astype(jnp.float32), ref3, rtol=5e-2, atol=5e-2), \
        "bf16 mismatch"

    print("KERNEL_OK")
</pallas_src>

<mosaic_0001>
module attributes {stable_mosaic.version = 11 : i64} {
  func.func @_fusion_packed_kernel(%arg0: i32, %arg1: memref<8x128xf32, #tpu.memory_space<vmem>>, %arg2: memref<8x128xf32, #tpu.memory_space<vmem>>, %arg3: memref<128x128xf32, #tpu.memory_space<vmem>>, %arg4: memref<128x128xf32, #tpu.memory_space<vmem>>, %arg5: memref<128x128xf32, #tpu.memory_space<vmem>>, %arg6: memref<3x128xf32, #tpu.memory_space<vmem>>, %arg7: memref<8x128xf32, #tpu.memory_space<vmem>>) attributes {dimension_semantics = [#tpu.dimension_semantics<parallel>], iteration_bounds = array<i64: 1>, scalar_prefetch = 0 : i64, scratch_operands = 0 : i64, tpu.core_type = #tpu.core_type<tc>, window_params = [{transform_indices = @transform_0, window_bounds = array<i64: 8, 128>}, {transform_indices = @transform_1, window_bounds = array<i64: 8, 128>}, {pipeline_mode = #tpu.pipeline_mode<synchronous>, transform_indices = @transform_2, window_bounds = array<i64: 128, 128>}, {pipeline_mode = #tpu.pipeline_mode<synchronous>, transform_indices = @transform_3, window_bounds = array<i64: 128, 128>}, {pipeline_mode = #tpu.pipeline_mode<synchronous>, transform_indices = @transform_4, window_bounds = array<i64: 128, 128>}, {pipeline_mode = #tpu.pipeline_mode<synchronous>, transform_indices = @transform_5, window_bounds = array<i64: 3, 128>}, {transform_indices = @transform_6, window_bounds = array<i64: 8, 128>}]} {
    %c0 = arith.constant 0 : index
    %c0_0 = arith.constant 0 : index
    %0 = vector.load %arg1[%c0, %c0_0] : memref<8x128xf32, #tpu.memory_space<vmem>>, vector<8x128xf32>
    %c0_1 = arith.constant 0 : index
    %c0_2 = arith.constant 0 : index
    %1 = vector.load %arg2[%c0_1, %c0_2] : memref<8x128xf32, #tpu.memory_space<vmem>>, vector<8x128xf32>
    %c0_3 = arith.constant 0 : index
    %c0_4 = arith.constant 0 : index
    %2 = vector.load %arg6[%c0_3, %c0_4] : memref<3x128xf32, #tpu.memory_space<vmem>>, vector<3x128xf32>
    %c0_5 = arith.constant 0 : index
    %c0_6 = arith.constant 0 : index
    %3 = vector.load %arg3[%c0_5, %c0_6] : memref<128x128xf32, #tpu.memory_space<vmem>>, vector<128x128xf32>
    %cst = arith.constant dense<0.000000e+00> : vector<8x128xf32>
    %4 = tpu.matmul %0, %3, %cst {dimension_numbers = #tpu.dot_dimension_numbers<[1], [0], [0], [1], [0, 0, 1, 1], [], []>, precision = #tpu.contract_precision<fp32>} : vector<8x128xf32>, vector<128x128xf32>, vector<8x128xf32> -> vector<8x128xf32>
    %c0_7 = arith.constant 0 : index
    %c0_8 = arith.constant 0 : index
    %5 = vector.load %arg4[%c0_7, %c0_8] : memref<128x128xf32, #tpu.memory_space<vmem>>, vector<128x128xf32>
    %cst_9 = arith.constant dense<0.000000e+00> : vector<8x128xf32>
    %6 = tpu.matmul %1, %5, %cst_9 {dimension_numbers = #tpu.dot_dimension_numbers<[1], [0], [0], [1], [0, 0, 1, 1], [], []>, precision = #tpu.contract_precision<fp32>} : vector<8x128xf32>, vector<128x128xf32>, vector<8x128xf32> -> vector<8x128xf32>
    %7 = arith.addf %4, %6 : vector<8x128xf32>
    %8 = vector.extract_strided_slice %2 {offsets = [0, 0], sizes = [1, 128], strides = [1, 1]} : vector<3x128xf32> to vector<1x128xf32>
    %9 = vector.broadcast %8 : vector<1x128xf32> to vector<8x128xf32>
    %10 = arith.addf %7, %9 : vector<8x128xf32>
    %c0_10 = arith.constant 0 : index
    %c0_11 = arith.constant 0 : index
    %11 = vector.load %arg5[%c0_10, %c0_11] : memref<128x128xf32, #tpu.memory_space<vmem>>, vector<128x128xf32>
    %cst_12 = arith.constant dense<0.000000e+00> : vector<8x128xf32>
    %12 = tpu.matmul %10, %11, %cst_12 {dimension_numbers = #tpu.dot_dimension_numbers<[1], [0], [0], [1], [0, 0, 1, 1], [], []>, precision = #tpu.contract_precision<fp32>} : vector<8x128xf32>, vector<128x128xf32>, vector<8x128xf32> -> vector<8x128xf32>
    %13 = arith.mulf %10, %10 : vector<8x128xf32>
    %cst_13 = arith.constant dense<0.000000e+00> : vector<8x128xf32>
    %14 = tpu.matmul %13, %11, %cst_13 {dimension_numbers = #tpu.dot_dimension_numbers<[1], [0], [0], [1], [0, 0, 1, 1], [], []>, precision = #tpu.contract_precision<fp32>} : vector<8x128xf32>, vector<128x128xf32>, vector<8x128xf32> -> vector<8x128xf32>
    %15 = arith.mulf %12, %12 : vector<8x128xf32>
    %16 = arith.subf %14, %15 : vector<8x128xf32>
    %cst_14 = arith.constant 0.000000e+00 : f32
    %17 = vector.broadcast %cst_14 : f32 to vector<8x128xf32>
    %18 = arith.maximumf %16, %17 : vector<8x128xf32>
    %19 = arith.subf %10, %12 : vector<8x128xf32>
    %cst_15 = arith.constant 9.99999974E-6 : f32
    %20 = vector.broadcast %cst_15 : f32 to vector<8x128xf32>
    %21 = arith.addf %18, %20 : vector<8x128xf32>
    %22 = math.rsqrt %21 : vector<8x128xf32>
    %23 = arith.mulf %19, %22 : vector<8x128xf32>
    %24 = vector.extract_strided_slice %2 {offsets = [1, 0], sizes = [1, 128], strides = [1, 1]} : vector<3x128xf32> to vector<1x128xf32>
    %25 = vector.broadcast %24 : vector<1x128xf32> to vector<8x128xf32>
    %26 = arith.mulf %23, %25 : vector<8x128xf32>
    %27 = vector.extract_strided_slice %2 {offsets = [2, 0], sizes = [1, 128], strides = [1, 1]} : vector<3x128xf32> to vector<1x128xf32>
    %28 = vector.broadcast %27 : vector<1x128xf32> to vector<8x128xf32>
    %29 = arith.addf %26, %28 : vector<8x128xf32>
    %c0_16 = arith.constant 0 : index
    %c0_17 = arith.constant 0 : index
    %30 = vector.load %arg7[%c0_16, %c0_17] : memref<8x128xf32, #tpu.memory_space<vmem>>, vector<8x128xf32>
    tpu.vector_store %arg7[%c0_16, %c0_17], %29 {strides = array<i32>} : memref<8x128xf32, #tpu.memory_space<vmem>>, vector<8x128xf32>,
    return
  }
  func.func @transform_0(%arg0: i32) -> (i32, i32) {
    %c0_i32 = arith.constant 0 : i32
    %c0_i32_0 = arith.constant 0 : i32
    return %arg0, %c0_i32 : i32, i32
  }
  func.func @transform_1(%arg0: i32) -> (i32, i32) {
    %c0_i32 = arith.constant 0 : i32
    %c0_i32_0 = arith.constant 0 : i32
    return %arg0, %c0_i32 : i32, i32
  }
  func.func @transform_2(%arg0: i32) -> (i32, i32) {
    %c0_i32 = arith.constant 0 : i32
    %c0_i32_0 = arith.constant 0 : i32
    %c0_i32_1 = arith.constant 0 : i32
    return %c0_i32, %c0_i32_0 : i32, i32
  }
  func.func @transform_3(%arg0: i32) -> (i32, i32) {
    %c0_i32 = arith.constant 0 : i32
    %c0_i32_0 = arith.constant 0 : i32
    %c0_i32_1 = arith.constant 0 : i32
    return %c0_i32, %c0_i32_0 : i32, i32
  }
  func.func @transform_4(%arg0: i32) -> (i32, i32) {
    %c0_i32 = arith.constant 0 : i32
    %c0_i32_0 = arith.constant 0 : i32
    %c0_i32_1 = arith.constant 0 : i32
    return %c0_i32, %c0_i32_0 : i32, i32
  }
  func.func @transform_5(%arg0: i32) -> (i32, i32) {
    %c0_i32 = arith.constant 0 : i32
    %c0_i32_0 = arith.constant 0 : i32
    %c0_i32_1 = arith.constant 0 : i32
    return %c0_i32, %c0_i32_0 : i32, i32
  }
  func.func @transform_6(%arg0: i32) -> (i32, i32) {
    %c0_i32 = arith.constant 0 : i32
    %c0_i32_0 = arith.constant 0 : i32
    return %arg0, %c0_i32 : i32, i32
  }
}

</mosaic_0001>

<llo_original>
// kernel: tile.18
$region0: #{tile.18}
  #allocation0 [shape = 's32[1]{0}', space=sflag, size = 0x4, scoped, tag = 'scoped memory for tile.18']
  %s0 = inlined_call_operand.vmem [shape: f32[4], index: 0, kind: input, shape index: {}]
  %s1 = inlined_call_operand.vmem [shape: f32[32,4], index: 1, kind: output, shape index: {}]
  // Predicated region
  $region2: #{tile.18} parent=0 // pred_check
    _
  $region3: #{tile.18} parent=0 // pred_check_branch
    %3 = sbr.rel (0) target = $region5
  $region4: #{tile.18} parent=0 // pred_region
    _
  $region5: #{tile.18} parent=0 // pred_fallthru
    _
  %v4 = vld [vmem:[%s0] ss:$0 sm:$0xff]
  %5 = vst [vmem:[%s1] sm:$0xff] %v4
  %s6 = scalar_lea.vmem %s1, 8
  %7 = vst [vmem:[%s6] sm:$0xff] %v4
  %s8 = scalar_lea.vmem %s1, 16
  %9 = vst [vmem:[%s8] sm:$0xff] %v4
  %s10 = scalar_lea.vmem %s1, 24
  %11 = vst [vmem:[%s10] sm:$0xff] %v4

// kernel: tile.27
$region0: #{tile.27}
  %s0 = inlined_call_operand.vmem [shape: f32[32,4], index: 0, kind: input, shape index: {}]
  %s1 = inlined_call_operand.vmem [shape: f32[1,128], index: 1, kind: output, shape index: {}]
  $region1: #{tile.27} parent=0
    #allocation0 [shape = 'u8[4096]{0}', space=vmem, size = 0x1000, scoped, tag = 'scoped mem for output reshape']
    %v2 = vld [vmem:[%s0] sm:$0x1]
    %vm3 = vcmask 31744
    %4 = vst.msk [vmem:[#allocation0] sm:$0x1] %vm3, %v2
    %s5 = scalar_lea.vmem %s0, 31
    %v6 = vld [vmem:[%s5] sm:$0x1]
    %7 = vrot.lane.b32.xlu0 %v6, 124
    %v8 = vpop.permute.xlu0 %7
    %vm9 = vcmask 1048544
    %10 = vst.msk [vmem:[#allocation0] sm:$0x1] %vm9, %v8
    %s11 = scalar_lea.vmem %s0, 30
    %v12 = vld [vmem:[%s11] sm:$0x1]
    %13 = vrot.lane.b32.xlu0 %v12, 120
    %v14 = vpop.permute.xlu0 %13
    %vm15 = vcmask 1015744
    %16 = vst.msk [vmem:[#allocation0] sm:$0x1] %vm15, %v14
    %s17 = scalar_lea.vmem %s0, 29
    %v18 = vld [vmem:[%s17] sm:$0x1]
    %19 = vrot.lane.b32.xlu0 %v18, 116
    %v20 = vpop.permute.xlu0 %19
    %vm21 = vcmask 982944
    %22 = vst.msk [vmem:[#allocation0] sm:$0x1] %vm21, %v20
    %s23 = scalar_lea.vmem %s0, 28
    %v24 = vld [vmem:[%s23] sm:$0x1]
    %25 = vrot.lane.b32.xlu0 %v24, 112
    %v26 = vpop.permute.xlu0 %25
    %vm27 = vcmask 950144
    %28 = vst.msk [vmem:[#allocation0] sm:$0x1] %vm27, %v26
    %s29 = scalar_lea.vmem %s0, 27
    %v30 = vld [vmem:[%s29] sm:$0x1]
    %31 = vrot.lane.b32.xlu0 %v30, 108
    %v32 = vpop.permute.xlu0 %31
    %vm33 = vcmask 917344
    %34 = vst.msk [vmem:[#allocation0] sm:$0x1] %vm33, %v32
    %s35 = scalar_lea.vmem %s0, 26
    %v36 = vld [vmem:[%s35] sm:$0x1]
    %37 = vrot.lane.b32.xlu0 %v36, 104
    %v38 = vpop.permute.xlu0 %37
    %vm39 = vcmask 884544
    %40 = vst.msk [vmem:[#allocation0] sm:$0x1] %vm39, %v38
    %s41 = scalar_lea.vmem %s0, 25
    %v42 = vld [vmem:[%s41] sm:$0x1]
    %43 = vrot.lane.b32.xlu0 %v42, 100
    %v44 = vpop.permute.xlu0 %43
    %vm45 = vcmask 851744
    %46 = vst.msk [vmem:[#allocation0] sm:$0x1] %vm45, %v44
    %s47 = scalar_lea.vmem %s0, 24
    %v48 = vld [vmem:[%s47] sm:$0x1]
    %49 = vrot.lane.b32.xlu0 %v48, 96
    %v50 = vpop.permute.xlu0 %49
    %vm51 = vcmask 818944
    %52 = vst.msk [vmem:[#allocation0] sm:$0x1] %vm51, %v50
    %s53 = scalar_lea.vmem %s0, 23
    %v54 = vld [vmem:[%s53] sm:$0x1]
    %55 = vrot.lane.b32.xlu0 %v54, 92
    %v56 = vpop.permute.xlu0 %55
    %vm57 = vcmask 786144
    %58 = vst.msk [vmem:[#allocation0] sm:$0x1] %vm57, %v56
    %s59 = scalar_lea.vmem %s0, 22
    %v60 = vld [vmem:[%s59] sm:$0x1]
    %61 = vrot.lane.b32.xlu0 %v60, 88
    %v62 = vpop.permute.xlu0 %61
    %vm63 = vcmask 753344
    %64 = vst.msk [vmem:[#allocation0] sm:$0x1] %vm63, %v62
    %s65 = scalar_lea.vmem %s0, 21
    %v66 = vld [vmem:[%s65] sm:$0x1]
    %67 = vrot.lane.b32.xlu0 %v66, 84
    %v68 = vpop.permute.xlu0 %67
    %vm69 = vcmask 720544
    %70 = vst.msk [vmem:[#allocation0] sm:$0x1] %vm69, %v68
    %s71 = scalar_lea.vmem %s0, 20
    %v72 = vld [vmem:[%s71] sm:$0x1]
    %73 = vrot.lane.b32.xlu0 %v72, 80
    %v74 = vpop.permute.xlu0 %73
    %vm75 = vcmask 687744
    %76 = vst.msk [vmem:[#allocation0] sm:$0x1] %vm75, %v74
    %s77 = scalar_lea.vmem %s0, 19
    %v78 = vld [vmem:[%s77] sm:$0x1]
    %79 = vrot.lane.b32.xlu0 %v78, 76
    %v80 = vpop.permute.xlu0 %79
    %vm81 = vcmask 654944
    %82 = vst.msk [vmem:[#allocation0] sm:$0x1] %vm81, %v80
    %s83 = scalar_lea.vmem %s0, 18
    %v84 = vld [vmem:[%s83] sm:$0x1]
    %85 = vrot.lane.b32.xlu0 %v84, 72
    %v86 = vpop.permute.xlu0 %85
    %vm87 = vcmask 622144
    %88 = vst.msk [vmem:[#allocation0] sm:$0x1] %vm87, %v86
    %s89 = scalar_lea.vmem %s0, 17
    %v90 = vld [vmem:[%s89] sm:$0x1]
    %91 = vrot.lane.b32.xlu0 %v90, 68
    %v92 = vpop.permute.xlu0 %91
    %vm93 = vcmask 589344
    %94 = vst.msk [vmem:[#allocation0] sm:$0x1] %vm93, %v92
    %s95 = scalar_lea.vmem %s0, 16
    %v96 = vld [vmem:[%s95] sm:$0x1]
    %97 = vrot.lane.b32.xlu0 %v96, 64
    %v98 = vpop.permute.xlu0 %97
    %vm99 = vcmask 556544
    %100 = vst.msk [vmem:[#allocation0] sm:$0x1] %vm99, %v98
    %s101 = scalar_lea.vmem %s0, 15
    %v102 = vld [vmem:[%s101] sm:$0x1]
    %103 = vrot.lane.b32.xlu0 %v102, 60
    %v104 = vpop.permute.xlu0 %103
    %vm105 = vcmask 523744
    %106 = vst.msk [vmem:[#allocation0] sm:$0x1] %vm105, %v104
    %s107 = scalar_lea.vmem %s0, 14
    %v108 = vld [vmem:[%s107] sm:$0x1]
    %109 = vrot.lane.b32.xlu0 %v108, 56
    %v110 = vpop.permute.xlu0 %109
    %vm111 = vcmask 490944
    %112 = vst.msk [vmem:[#allocation0] sm:$0x1] %vm111, %v110
    %s113 = scalar_lea.vmem %s0, 13
    %v114 = vld [vmem:[%s113] sm:$0x1]
    %115 = vrot.lane.b32.xlu0 %v114, 52
    %v116 = vpop.permute.xlu0 %115
    %vm117 = vcmask 458144
    %118 = vst.msk [vmem:[#allocation0] sm:$0x1] %vm117, %v116
    %s119 = scalar_lea.vmem %s0, 12
    %v120 = vld [vmem:[%s119] sm:$0x1]
    %121 = vrot.lane.b32.xlu0 %v120, 48
    %v122 = vpop.permute.xlu0 %121
    %vm123 = vcmask 425344
    %124 = vst.msk [vmem:[#allocation0] sm:$0x1] %vm123, %v122
    %s125 = scalar_lea.vmem %s0, 11
    %v126 = vld [vmem:[%s125] sm:$0x1]
    %127 = vrot.lane.b32.xlu0 %v126, 44
    %v128 = vpop.permute.xlu0 %127
    %vm129 = vcmask 392544
    %130 = vst.msk [vmem:[#allocation0] sm:$0x1] %vm129, %v128
    %s131 = scalar_lea.vmem %s0, 10
    %v132 = vld [vmem:[%s131] sm:$0x1]
    %133 = vrot.lane.b32.xlu0 %v132, 40
    %v134 = vpop.permute.xlu0 %133
    %vm135 = vcmask 359744
    %136 = vst.msk [vmem:[#allocation0] sm:$0x1] %vm135, %v134
    %s137 = scalar_lea.vmem %s0, 9
    %v138 = vld [vmem:[%s137] sm:$0x1]
    %139 = vrot.lane.b32.xlu0 %v138, 36
    %v140 = vpop.permute.xlu0 %139
    %vm141 = vcmask 326944
    %142 = vst.msk [vmem:[#allocation0] sm:$0x1] %vm141, %v140
    %s143 = scalar_lea.vmem %s0, 8
    %v144 = vld [vmem:[%s143] sm:$0x1]
    %145 = vrot.lane.b32.xlu0 %v144, 32
    %v146 = vpop.permute.xlu0 %145
    %vm147 = vcmask 294144
    %148 = vst.msk [vmem:[#allocation0] sm:$0x1] %vm147, %v146
    %s149 = scalar_lea.vmem %s0, 7
    %v150 = vld [vmem:[%s149] sm:$0x1]
    %151 = vrot.lane.b32.xlu0 %v150, 28
    %v152 = vpop.permute.xlu0 %151
    %vm153 = vcmask 261344
    %154 = vst.msk [vmem:[#allocation0] sm:$0x1] %vm153, %v152
    %s155 = scalar_lea.vmem %s0, 6
    %v156 = vld [vmem:[%s155] sm:$0x1]
    %157 = vrot.lane.b32.xlu0 %v156, 24
    %v158 = vpop.permute.xlu0 %157
    %vm159 = vcmask 228544
    %160 = vst.msk [vmem:[#allocation0] sm:$0x1] %vm159, %v158
    %s161 = scalar_lea.vmem %s0, 5
    %v162 = vld [vmem:[%s161] sm:$0x1]
    %163 = vrot.lane.b32.xlu0 %v162, 20
    %v164 = vpop.permute.xlu0 %163
    %vm165 = vcmask 195744
    %166 = vst.msk [vmem:[#allocation0] sm:$0x1] %vm165, %v164
    %s167 = scalar_lea.vmem %s0, 4
    %v168 = vld [vmem:[%s167] sm:$0x1]
    %169 = vrot.lane.b32.xlu0 %v168, 16
    %v170 = vpop.permute.xlu0 %169
    %vm171 = vcmask 162944
    %172 = vst.msk [vmem:[#allocation0] sm:$0x1] %vm171, %v170
    %s173 = scalar_lea.vmem %s0, 3
    %v174 = vld [vmem:[%s173] sm:$0x1]
    %175 = vrot.lane.b32.xlu0 %v174, 12
    %v176 = vpop.permute.xlu0 %175
    %vm177 = vcmask 130144
    %178 = vst.msk [vmem:[#allocation0] sm:$0x1] %vm177, %v176
    %s179 = scalar_lea.vmem %s0, 2
    %v180 = vld [vmem:[%s179] sm:$0x1]
    %181 = vrot.lane.b32.xlu0 %v180, 8
    %v182 = vpop.permute.xlu0 %181
    %vm183 = vcmask 97344
    %184 = vst.msk [vmem:[#allocation0] sm:$0x1] %vm183, %v182
    %s185 = scalar_lea.vmem %s0, 1
    %v186 = vld [vmem:[%s185] sm:$0x1]
    %187 = vrot.lane.b32.xlu0 %v186, 4
    %v188 = vpop.permute.xlu0 %187
    %vm189 = vcmask 64544
    %190 = vst.msk [vmem:[#allocation0] sm:$0x1] %vm189, %v188
    %s192 = sshllo.u32 0, 1
    %v194 = vld [vmem:[#allocation0] sm:%s192]
    %s195 = sshllo.u32 0, 1
    %196 = vst [vmem:[%s1] sm:%s195] %v194

</llo_original>
